<compile_context>
chip_gen: v6e
topology: v6e:2x2x1
jax: 0.10.0
libtpu: 0.0.40
codegen_flags: <defaults>
</compile_context>

<pallas_src>
import math

import jax
import jax.numpy as jnp
from jax.experimental import pallas as pl
from jax.experimental.pallas import tpu as pltpu


_VMEM_BUDGET = 12 * 1024 * 1024  # working-set target; fits v5e's 16 MiB default


def _round_up(x, m):
    return ((x + m - 1) // m) * m


# ---------------------------------------------------------------------------
# Kernels
# ---------------------------------------------------------------------------

def _make_k1_kernel(compute_dtype):
    """1x1 conv: one matmul + (bias, relu, cast) epilogue per grid step."""
    def kernel(x_ref, w_ref, b_ref, o_ref):
        # x_ref: (1, Cin, t) native dtype | w_ref: (cb, Cin) bf16 (BN-scale folded)
        # b_ref: (cb, 1) f32              | o_ref: (1, cb, t) out_dtype
        x = x_ref[0].astype(compute_dtype)
        acc = jnp.dot(w_ref[...], x, preferred_element_type=jnp.float32)
        o_ref[0] = jnp.maximum(acc + b_ref[...], 0.0).astype(o_ref.dtype)
    return kernel


def _make_tap_kernel(shifts, lout, compute_dtype):
    """k x k conv as kh*kw shifted-window matmuls accumulated in f32."""
    def kernel(x_ref, w_ref, b_ref, o_ref):
        # x_ref: (1, Cin, Lin) native dtype (flattened, zero-padded image)
        # w_ref: (T, Cout, Cin) bf16 per-tap weights (BN-scale folded)
        # b_ref: (Cout, 1) f32 | o_ref: (1, Cout, Lout) out_dtype
        acc = None
        for t, s in enumerate(shifts):            # static unrolled tap loop
            xs = x_ref[0, :, pl.ds(s, lout)].astype(compute_dtype)
            p = jnp.dot(w_ref[t], xs, preferred_element_type=jnp.float32)
            acc = p if acc is None else acc + p
        o_ref[0] = jnp.maximum(acc + b_ref[...], 0.0).astype(o_ref.dtype)
    return kernel


# ---------------------------------------------------------------------------
# Tile selection
# ---------------------------------------------------------------------------

def _pick_cout_block(cout, max_blk=256):
    if cout <= max_blk:
        return cout
    for b in range(max_blk, 7, -8):               # multiples of 8 only
        if cout % b == 0:
            return b
    return cout


def _pick_hw_tile(hw_pad, cin, cout_blk, in_bytes, out_bytes):
    """Largest 128-multiple tile dividing hw_pad whose double-buffered working
    set stays under the VMEM budget (min 128, max 2048)."""
    fixed = 2 * cout_blk * cin * 2 + 2 * cout_blk * 4     # weight + bias (x2 buf)
    per_lane = 2 * (cin * in_bytes + cout_blk * out_bytes)
    t = max(128, ((_VMEM_BUDGET - fixed) // per_lane) // 128 * 128)
    t = min(t, 2048, hw_pad)
    while hw_pad % t:
        t -= 128
    return t


# ---------------------------------------------------------------------------
# Fused forward
# ---------------------------------------------------------------------------

def conv_bn_relu_2d(x, w, gamma, beta, running_mean, running_var, *,
                    conv_bias=None, stride=1, padding=0, dilation=1, groups=1,
                    eps=1e-5, out_dtype=jnp.bfloat16, compute_dtype=jnp.bfloat16):
    """Fused Conv2d + BatchNorm2d(eval, running stats) + ReLU, NCHW layout."""
    N, Cin, H, W = x.shape
    Cout, Cin_w, kh, kw = w.shape
    assert groups == 1 and Cin == Cin_w, "groups != 1 not supported"  # TODO(synk)

    Ho = (H + 2 * padding - dilation * (kh - 1) - 1) // stride + 1
    Wo = (W + 2 * padding - dilation * (kw - 1) - 1) // stride + 1

    # Fold BatchNorm (and optional conv bias) into per-channel weight/bias.
    scale = (gamma / jnp.sqrt(running_var + eps)).astype(jnp.float32)
    mean_eff = running_mean if conv_bias is None else running_mean - conv_bias
    bias = (beta - mean_eff * scale).astype(jnp.float32).reshape(Cout, 1)
    w_folded = w.astype(jnp.float32) * scale[:, None, None, None]

    in_bytes = jnp.dtype(x.dtype).itemsize
    out_bytes = jnp.dtype(out_dtype).itemsize

    if kh == 1 and kw == 1 and padding == 0:
        # ---------------- 1x1 fast path: no im2col at all ----------------
        xs = x[:, :, ::stride, ::stride] if stride != 1 else x
        HW = Ho * Wo
        col = xs.reshape(N, Cin, HW)                       # native dtype
        HWp = _round_up(HW, 128)                           # lane-dense stores
        if HWp != HW:
            col = jnp.pad(col, ((0, 0), (0, 0), (0, HWp - HW)))

        wmat = w_folded.reshape(Cout, Cin).astype(compute_dtype)
        cb = _pick_cout_block(Cout)
        t = _pick_hw_tile(HWp, Cin, cb, in_bytes, out_bytes)
        grid = (N, Cout // cb, HWp // t)

        out = pl.pallas_call(
            _make_k1_kernel(compute_dtype),
            out_shape=jax.ShapeDtypeStruct((N, Cout, HWp), out_dtype),
            grid_spec=pltpu.PrefetchScalarGridSpec(
                num_scalar_prefetch=0,
                grid=grid,
                in_specs=[
                    pl.BlockSpec((1, Cin, t), lambda n, c, s: (n, 0, s)),
                    pl.BlockSpec((cb, Cin), lambda n, c, s: (c, 0)),
                    pl.BlockSpec((cb, 1), lambda n, c, s: (c, 0)),
                ],
                out_specs=pl.BlockSpec((1, cb, t), lambda n, c, s: (n, c, s)),
            ),
            compiler_params=pltpu.CompilerParams(
                dimension_semantics=("parallel", "parallel", "parallel")),
        )(col, wmat, bias)

        if HWp != HW:
            out = out[:, :, :HW]
        return out.reshape(N, Cout, Ho, Wo)

    # ---------------- general path: in-kernel tap accumulation ----------------
    Hp, Wp = H + 2 * padding, W + 2 * padding
    xp = jnp.pad(x, ((0, 0), (0, 0), (padding, padding), (padding, padding)))
    Hrows = (Ho - 1) * stride + 1                      # padded-grid rows evaluated
    Lout = _round_up(Hrows * Wp, 128)
    smax = (kh - 1) * dilation * Wp + (kw - 1) * dilation
    Lin = _round_up(max(Lout + smax, Hp * Wp), 128)
    xpf = jnp.pad(xp.reshape(N, Cin, Hp * Wp),
                  ((0, 0), (0, 0), (0, Lin - Hp * Wp)))

    shifts = [i * dilation * Wp + j * dilation
              for i in range(kh) for j in range(kw)]
    wtap = jnp.transpose(w_folded, (2, 3, 0, 1)).reshape(kh * kw, Cout, Cin)
    wtap = wtap.astype(compute_dtype)

    # Whole (padded) image per sample stays resident; raise scoped VMEM if needed.
    ws = (2 * (Cin * Lin * in_bytes + Cout * Lout * out_bytes)
          + 2 * kh * kw * Cout * Cin * 2 + Cout * 8)
    vmem_limit = None
    if ws > _VMEM_BUDGET:
        # TODO(synk): tile over output-row bands with a halo'd input window for
        # very large feature maps instead of raising the limit.
        vmem_limit = int(min(ws + (8 << 20), 48 << 20))

    out = pl.pallas_call(
        _make_tap_kernel(shifts, Lout, compute_dtype),
        out_shape=jax.ShapeDtypeStruct((N, Cout, Lout), out_dtype),
        grid_spec=pltpu.PrefetchScalarGridSpec(
            num_scalar_prefetch=0,
            grid=(N,),
            in_specs=[
                pl.BlockSpec((1, Cin, Lin), lambda n: (n, 0, 0)),
                pl.BlockSpec((kh * kw, Cout, Cin), lambda n: (0, 0, 0)),
                pl.BlockSpec((Cout, 1), lambda n: (0, 0)),
            ],
            out_specs=pl.BlockSpec((1, Cout, Lout), lambda n: (n, 0, 0)),
        ),
        compiler_params=pltpu.CompilerParams(
            dimension_semantics=("parallel",),
            vmem_limit_bytes=vmem_limit),
    )(xpf, wtap, bias)

    y = out[:, :, :Hrows * Wp].reshape(N, Cout, Hrows, Wp)
    if stride != 1:
        y = y[:, :, ::stride, ::stride]
    return y[:, :, :Ho, :Wo]


# ---------------------------------------------------------------------------
# Parameter init mirroring ConvBnrelu2d_1.__init__ + plain-JAX reference
# ---------------------------------------------------------------------------

def init_conv_bn_relu(key, in_channels, out_channels, kernel_size=1):
    fan_in = in_channels * kernel_size * kernel_size
    fan_out = out_channels * kernel_size * kernel_size
    limit = math.sqrt(6.0 / (fan_in + fan_out))
    w = jax.random.uniform(key, (out_channels, in_channels, kernel_size, kernel_size),
                           jnp.float32, -limit, limit)
    return {'w': w,
            'gamma': jnp.ones((out_channels,), jnp.float32),
            'beta': jnp.zeros((out_channels,), jnp.float32),
            'mean': jnp.zeros((out_channels,), jnp.float32),
            'var': jnp.ones((out_channels,), jnp.float32)}


def reference_forward(p, x, *, stride=1, padding=0, dilation=1, eps=1e-5):
    y = jax.lax.conv_general_dilated(
        x, p['w'], window_strides=(stride, stride),
        padding=((padding, padding), (padding, padding)),
        rhs_dilation=(dilation, dilation),
        dimension_numbers=('NCHW', 'OIHW', 'NCHW'))
    scale = p['gamma'] / jnp.sqrt(p['var'] + eps)
    bias = p['beta'] - p['mean'] * scale
    y = y * scale[None, :, None, None] + bias[None, :, None, None]
    return jnp.maximum(y, 0.0)


# ---------------------------------------------------------------------------

if __name__ == "__main__":
    key = jax.random.PRNGKey(0)
    kp1, kp2, kp3, kx1, kx2 = jax.random.split(key, 5)

    N, Cin, Cout = 2, 16, 32

    def run_case(params, x, tag, **conv_kw):
        fwd = jax.jit(lambda p, xx: conv_bn_relu_2d(
            xx, p['w'], p['gamma'], p['beta'], p['mean'], p['var'], **conv_kw))
        y = fwd(params, x)
        jax.block_until_ready(y)
        ref = reference_forward(params, x, **conv_kw)
        assert y.shape == ref.shape, f"{tag}: shape {y.shape} vs {ref.shape}"
        yf = y.astype(jnp.float32)
        assert bool(jnp.all(jnp.isfinite(yf))), f"{tag}: non-finite output"
        assert bool(jnp.all(yf >= 0)), f"{tag}: ReLU violated"
        err = float(jnp.max(jnp.abs(yf - ref)))
        assert err < 0.1, f"{tag}: mismatch vs reference: {err}"

    # Module default: kernel_size=1, padding=0, stride=1, bias=False (HW=256).
    x1 = jax.random.normal(kx1, (N, Cin, 16, 16), jnp.float32)
    run_case(init_conv_bn_relu(kp1, Cin, Cout, 1), x1, "k1")

    # 1x1 path with HW not a multiple of 128 (exercises lane padding).
    x2 = jax.random.normal(kx2, (N, Cin, 12, 12), jnp.float32)
    run_case(init_conv_bn_relu(kp2, Cin, Cout, 1), x2, "k1_pad128")

    # General path: kernel_size=3, padding=1 (same spatial size), tap kernel.
    run_case(init_conv_bn_relu(kp3, Cin, Cout, 3), x1, "k3", padding=1)

    print("KERNEL_OK")
</pallas_src>

<mosaic_0001>
module attributes {stable_mosaic.version = 11 : i64} {
  func.func @kernel(%arg0: i32, %arg1: i32, %arg2: i32, %arg3: memref<1x16x256xf32, #tpu.memory_space<vmem>>, %arg4: memref<32x16xbf16, #tpu.memory_space<vmem>>, %arg5: memref<32x1xf32, #tpu.memory_space<vmem>>, %arg6: memref<1x32x256xbf16, #tpu.memory_space<vmem>>) attributes {dimension_semantics = [#tpu.dimension_semantics<parallel>, #tpu.dimension_semantics<parallel>, #tpu.dimension_semantics<parallel>], iteration_bounds = array<i64: 2, 1, 1>, scalar_prefetch = 0 : i64, scratch_operands = 0 : i64, tpu.core_type = #tpu.core_type<tc>, window_params = [{transform_indices = @transform_0, window_bounds = array<i64: 1, 16, 256>}, {transform_indices = @transform_1, window_bounds = array<i64: 32, 16>}, {transform_indices = @transform_2, window_bounds = array<i64: 32, 1>}, {transform_indices = @transform_3, window_bounds = array<i64: 1, 32, 256>}]} {
    %c0 = arith.constant 0 : index
    %c0_0 = arith.constant 0 : index
    %c0_1 = arith.constant 0 : index
    %0 = vector.load %arg3[%c0, %c0_0, %c0_1] : memref<1x16x256xf32, #tpu.memory_space<vmem>>, vector<1x16x256xf32>
    %1 = vector.shape_cast %0 : vector<1x16x256xf32> to vector<16x256xf32>
    %2 = arith.truncf %1 : vector<16x256xf32> to vector<16x256xbf16>
    %c0_2 = arith.constant 0 : index
    %c0_3 = arith.constant 0 : index
    %3 = vector.load %arg4[%c0_2, %c0_3] : memref<32x16xbf16, #tpu.memory_space<vmem>>, vector<32x16xbf16>
    %cst = arith.constant dense<0.000000e+00> : vector<32x256xf32>
    %4 = tpu.matmul %3, %2, %cst {dimension_numbers = #tpu.dot_dimension_numbers<[1], [0], [0], [1], [0, 0, 1, 1], [], []>} : vector<32x16xbf16>, vector<16x256xbf16>, vector<32x256xf32> -> vector<32x256xf32>
    %c0_4 = arith.constant 0 : index
    %c0_5 = arith.constant 0 : index
    %5 = vector.load %arg5[%c0_4, %c0_5] : memref<32x1xf32, #tpu.memory_space<vmem>>, vector<32x1xf32>
    %6 = vector.broadcast %5 : vector<32x1xf32> to vector<32x256xf32>
    %7 = arith.addf %4, %6 : vector<32x256xf32>
    %cst_6 = arith.constant 0.000000e+00 : f32
    %8 = vector.broadcast %cst_6 : f32 to vector<32x256xf32>
    %9 = arith.maximumf %7, %8 : vector<32x256xf32>
    %10 = arith.truncf %9 : vector<32x256xf32> to vector<32x256xbf16>
    %c0_7 = arith.constant 0 : index
    %c0_8 = arith.constant 0 : index
    %c0_9 = arith.constant 0 : index
    %11 = vector.load %arg6[%c0_7, %c0_8, %c0_9] : memref<1x32x256xbf16, #tpu.memory_space<vmem>>, vector<1x32x256xbf16>
    %12 = vector.shape_cast %11 : vector<1x32x256xbf16> to vector<32x256xbf16>
    %13 = vector.shape_cast %10 : vector<32x256xbf16> to vector<1x32x256xbf16>
    tpu.vector_store %arg6[%c0_7, %c0_8, %c0_9], %13 {strides = array<i32>} : memref<1x32x256xbf16, #tpu.memory_space<vmem>>, vector<1x32x256xbf16>,
    return
  }
  func.func @transform_0(%arg0: i32, %arg1: i32, %arg2: i32) -> (i32, i32, i32) {
    %c0_i32 = arith.constant 0 : i32
    %c0_i32_0 = arith.constant 0 : i32
    return %arg0, %c0_i32, %arg2 : i32, i32, i32
  }
  func.func @transform_1(%arg0: i32, %arg1: i32, %arg2: i32) -> (i32, i32) {
    %c0_i32 = arith.constant 0 : i32
    %c0_i32_0 = arith.constant 0 : i32
    return %arg1, %c0_i32 : i32, i32
  }
  func.func @transform_2(%arg0: i32, %arg1: i32, %arg2: i32) -> (i32, i32) {
    %c0_i32 = arith.constant 0 : i32
    %c0_i32_0 = arith.constant 0 : i32
    return %arg1, %c0_i32 : i32, i32
  }
  func.func @transform_3(%arg0: i32, %arg1: i32, %arg2: i32) -> (i32, i32, i32) {
    %c0_i32 = arith.constant 0 : i32
    return %arg0, %arg1, %arg2 : i32, i32, i32
  }
}

</mosaic_0001>

<llo_original>
// kernel: _lambda_.1
$region0: #{_lambda_.1}
  #allocation0 [shape = 'u32[]', space=smem, size = 0x4, offset = 0x4, fixed_abs, tag = 'smem constant byte address 0x4 - core index']
  #allocation1 [shape = 'u32[144,128]{1,0:T(1,128)}', space=vmem, size = 0x12000, scoped, tag = 'internal scratch']
  %s0 = inlined_call_operand.vmem [shape: f32[2,16,256], index: 0, kind: input, shape index: {}]
  %s1 = inlined_call_operand.vmem [shape: bf16[32,16], index: 1, kind: input, shape index: {}]
  %s2 = inlined_call_operand.vmem [shape: f32[32,1], index: 2, kind: input, shape index: {}]
  %s3 = inlined_call_operand.vmem [shape: bf16[2,32,256], index: 3, kind: output, shape index: {}]
  %s4 = sld [smem:[#allocation0]]
  $region45: #{_lambda_.1} parent=0
    _
  %s6 = ssub.s32 1, %s4
  %s7 = scalar_select 0, %s6, %s4
  loop: start=0, step=1, limit=4
  $region2: #{_lambda_.1} parent=0 // loop_pre_header
    _
  $region3: #{_lambda_.1} parent=0 // loop_header
    %s9 = sphi 0, %s13
    %p10 = scmp.ge.s32.totalorder %s9, 4
    %s16 = sphi 0, %s35
    %s17 = sphi 0, %s31
    %s18 = sphi 0, %s27
    %s19 = sphi 0, %s16
    %s20 = sphi 0, %s17
    %s21 = sphi 0, %s18
    %s22 = sphi 0, %s19
    %s23 = sphi 0, %s20
    %s24 = sphi 0, %s21
    %s40 = sphi 0, %s42
    %s43 = sphi 0, %s40
    %s44 = sphi 0, %s43
    %s60 = sphi 0, %s44
    %s66 = sphi 0, %s68
    %s69 = sphi 0, %s66
    %s70 = sphi 0, %s69
    %s86 = sphi 0, %s70
    %s92 = sphi 0, %s94
    %s95 = sphi 0, %s92
    %s96 = sphi 0, %s95
    %s112 = sphi 0, %s96
    %s122 = sphi 0, %s124
    %s125 = sphi 0, %s122
    %s126 = sphi 0, %s125
    %s142 = sphi 0, %s126
  $region4: #{_lambda_.1} parent=0 // loop_header_branch
    %12 = sbr.rel (%p10) target = $region8
  $region5: #{_lambda_.1} parent=0 // loop_body
    %s14 = ssub.s32 %s9, 1
    %s15 = ssub.s32 %s9, 2
    %s25 = sadd.s32 1, %s18
    %p26 = scmp.ge.s32.totalorder %s25, 1
    %s27 = scalar_select %p26, 0, %s25
    %s28 = sadd.s32 1, %s17
    %s29 = scalar_select %p26, %s28, %s17
    %p30 = scmp.ge.s32.totalorder %s29, 1
    %s31 = scalar_select %p30, 0, %s29
    %s32 = sadd.s32 1, %s16
    %s33 = scalar_select %p30, %s32, %s16
    %p34 = scmp.ge.s32.totalorder %s33, 2
    %s35 = scalar_select %p34, 0, %s33
    %s36 = ssub.s32 %s16, %s35
    %s37 = ssub.s32 %s18, %s27
    %s38 = sor.u32 %s36, %s37
    %p39 = scmp.eq.s32.totalorder %s38, 0
    %s41 = sadd.s32 %s40, 1
    %s42 = scalar_select %p39, %s40, %s41
    %p45 = pneg %p39
    %p46 = scmp.eq.s32.totalorder %s9, 1
    %p47 = por %p45, %p46
    %p48 = scmp.ne.s32.totalorder %s40, %s43
    %p49 = scmp.eq.s32.totalorder %s9, 0
    %p50 = por %p48, %p49
    %p51 = scmp.ne.s32.totalorder %s40, %s43
    %p52 = scmp.eq.s32.totalorder %s14, 1
    %p53 = por %p51, %p52
    %p54 = scmp.ne.s32.totalorder %s43, %s44
    %p55 = scmp.eq.s32.totalorder %s14, 0
    %p56 = por %p54, %p55
    %p57 = scmp.ne.s32.totalorder %s43, %s44
    %p58 = scmp.eq.s32.totalorder %s15, 1
    %p59 = por %p57, %p58
    %p61 = scmp.ne.s32.totalorder %s44, %s60
    %p62 = scmp.eq.s32.totalorder %s15, 0
    %p63 = por %p61, %p62
    %s64 = ssub.s32 %s17, %s31
    %p65 = scmp.eq.s32.totalorder %s64, 0
    %s67 = sadd.s32 %s66, 1
    %s68 = scalar_select %p65, %s66, %s67
    %p71 = pneg %p65
    %p72 = scmp.eq.s32.totalorder %s9, 1
    %p73 = por %p71, %p72
    %p74 = scmp.ne.s32.totalorder %s66, %s69
    %p75 = scmp.eq.s32.totalorder %s9, 0
    %p76 = por %p74, %p75
    %p77 = scmp.ne.s32.totalorder %s66, %s69
    %p78 = scmp.eq.s32.totalorder %s14, 1
    %p79 = por %p77, %p78
    %p80 = scmp.ne.s32.totalorder %s69, %s70
    %p81 = scmp.eq.s32.totalorder %s14, 0
    %p82 = por %p80, %p81
    %p83 = scmp.ne.s32.totalorder %s69, %s70
    %p84 = scmp.eq.s32.totalorder %s15, 1
    %p85 = por %p83, %p84
    %p87 = scmp.ne.s32.totalorder %s70, %s86
    %p88 = scmp.eq.s32.totalorder %s15, 0
    %p89 = por %p87, %p88
    %s90 = ssub.s32 %s17, %s31
    %p91 = scmp.eq.s32.totalorder %s90, 0
    %s93 = sadd.s32 %s92, 1
    %s94 = scalar_select %p91, %s92, %s93
    %p97 = pneg %p91
    %p98 = scmp.eq.s32.totalorder %s9, 1
    %p99 = por %p97, %p98
    %p100 = scmp.ne.s32.totalorder %s92, %s95
    %p101 = scmp.eq.s32.totalorder %s9, 0
    %p102 = por %p100, %p101
    %p103 = scmp.ne.s32.totalorder %s92, %s95
    %p104 = scmp.eq.s32.totalorder %s14, 1
    %p105 = por %p103, %p104
    %p106 = scmp.ne.s32.totalorder %s95, %s96
    %p107 = scmp.eq.s32.totalorder %s14, 0
    %p108 = por %p106, %p107
    %p109 = scmp.ne.s32.totalorder %s95, %s96
    %p110 = scmp.eq.s32.totalorder %s15, 1
    %p111 = por %p109, %p110
    %p113 = scmp.ne.s32.totalorder %s96, %s112
    %p114 = scmp.eq.s32.totalorder %s15, 0
    %p115 = por %p113, %p114
    %s116 = ssub.s32 %s16, %s35
    %s117 = ssub.s32 %s17, %s31
    %s118 = sor.u32 %s116, %s117
    %s119 = ssub.s32 %s18, %s27
    %s120 = sor.u32 %s118, %s119
    %p121 = scmp.eq.s32.totalorder %s120, 0
    %s123 = sadd.s32 %s122, 1
    %s124 = scalar_select %p121, %s122, %s123
    %p127 = pneg %p121
    %p128 = scmp.eq.s32.totalorder %s9, 1
    %p129 = por %p127, %p128
    %p130 = scmp.ne.s32.totalorder %s122, %s125
    %p131 = scmp.eq.s32.totalorder %s9, 0
    %p132 = por %p130, %p131
    %p133 = scmp.ne.s32.totalorder %s122, %s125
    %p134 = scmp.eq.s32.totalorder %s14, 1
    %p135 = por %p133, %p134
    %p136 = scmp.ne.s32.totalorder %s125, %s126
    %p137 = scmp.eq.s32.totalorder %s14, 0
    %p138 = por %p136, %p137
    %p139 = scmp.ne.s32.totalorder %s125, %s126
    %p140 = scmp.eq.s32.totalorder %s15, 1
    %p141 = por %p139, %p140
    %p143 = scmp.ne.s32.totalorder %s126, %s142
    %p144 = scmp.eq.s32.totalorder %s15, 0
    %p145 = por %p143, %p144
    %p146 = scmp.le.s32.totalorder 1, %s9
    %p147 = scmp.lt.s32.totalorder %s9, 3
    %p148 = pnand %p146, %p147
    %p149 = pneg %p148
    // Predicated region
    $region9: #{_lambda_.1} parent=5 // pred_check
      _
    $region10: #{_lambda_.1} parent=5 // pred_check_branch
      %151 = sbr.rel (%p148) target = $region12
    $region11: #{_lambda_.1} parent=5 // pred_region
      %s152 = ssub.s32 %s9, 1
      // Predicated region
      $region13: #{_lambda_.1} parent=11 // pred_check
        %p153 = pneg %p82
      $region14: #{_lambda_.1} parent=11 // pred_check_branch
        %155 = sbr.rel (%p153) target = $region16
      $region15: #{_lambda_.1} parent=11 // pred_region
        %s156 = smul.u32 4, %s20
        %p157 = scmp.lt.s32.totalorder %s156, 3
        %s158 = scalar_select %p157, %s156, 3
        %s159 = smul.addr %s158, 4
        %s160 = scalar_lea.vmem %s1, %s159
        %s161 = smul.u32 4, %s20
      $region16: #{_lambda_.1} parent=11 // pred_fallthru
        _
      // Predicated region
      $region17: #{_lambda_.1} parent=11 // pred_check
        %p162 = pneg %p108
      $region18: #{_lambda_.1} parent=11 // pred_check_branch
        %164 = sbr.rel (%p162) target = $region20
      $region19: #{_lambda_.1} parent=11 // pred_region
        %s165 = smul.u32 4, %s20
        %p166 = scmp.lt.s32.totalorder %s165, 3
        %s167 = scalar_select %p166, %s165, 3
        %s168 = smul.addr %s167, 8
        %s169 = scalar_lea.vmem %s2, %s168
        %s170 = smul.u32 4, %s20
      $region20: #{_lambda_.1} parent=11 // pred_fallthru
        _
    $region12: #{_lambda_.1} parent=5 // pred_fallthru
      _
    %p171 = scmp.lt.s32.totalorder %s9, 2
    // Predicated region
    $region21: #{_lambda_.1} parent=5 // pred_check
      %p172 = pneg %p171
    $region22: #{_lambda_.1} parent=5 // pred_check_branch
      %174 = sbr.rel (%p172) target = $region24
    $region23: #{_lambda_.1} parent=5 // pred_region
      // Predicated region
      $region25: #{_lambda_.1} parent=23 // pred_check
        %p175 = pneg %p50
      $region26: #{_lambda_.1} parent=23 // pred_check_branch
        %177 = sbr.rel (%p175) target = $region28
      $region27: #{_lambda_.1} parent=23 // pred_region
        %s178 = smul.u32 2, %s18
        %p179 = scmp.lt.s32.totalorder %s16, 1
        %s180 = scalar_select %p179, %s16, 1
        %p181 = scmp.lt.s32.totalorder %s178, 1
        %s182 = scalar_select %p181, %s178, 1
        %s183 = smul.addr %s180, 4
        %s184 = sadd.s32 %s182, %s183
        %s185 = smul.addr %s184, 8
        %s186 = scalar_lea.vmem %s0, %s185
        %s187 = smul.u32 2, %s18
      $region28: #{_lambda_.1} parent=23 // pred_fallthru
        _
    $region24: #{_lambda_.1} parent=5 // pred_fallthru
      _
    %p188 = scmp.le.s32.totalorder 1, %s9
    %p189 = scmp.lt.s32.totalorder %s9, 3
    %p190 = pnand %p188, %p189
    %p191 = pneg %p190
    // Predicated region
    $region29: #{_lambda_.1} parent=5 // pred_check
      _
    $region30: #{_lambda_.1} parent=5 // pred_check_branch
      %193 = sbr.rel (%p190) target = $region32
    $region31: #{_lambda_.1} parent=5 // pred_region
      %s194 = ssub.s32 %s9, 1
      %s195 = smul.u32 2, %s21
      %p196 = scmp.lt.s32.totalorder %s19, 1
      %s197 = scalar_select %p196, %s19, 1
      %p198 = scmp.lt.s32.totalorder %s195, 1
      %s199 = scalar_select %p198, %s195, 1
      %s200 = smul.addr %s197, 4
      %s201 = sadd.s32 %s199, %s200
      %s202 = smul.addr %s201, 8
      %s203 = scalar_lea.vmem %s0, %s202
      %p204 = pneg %p56
      %p205 = pneg %p53
      %s206 = smul.u32 4, %s20
      %p207 = scmp.lt.s32.totalorder %s206, 3
      %s208 = scalar_select %p207, %s206, 3
      %s209 = smul.addr %s208, 4
      %s210 = scalar_lea.vmem %s1, %s209
      %p211 = pneg %p82
      %p212 = pneg %p79
      %s213 = smul.u32 4, %s20
      %p214 = scmp.lt.s32.totalorder %s213, 3
      %s215 = scalar_select %p214, %s213, 3
      %s216 = smul.addr %s215, 8
      %s217 = scalar_lea.vmem %s2, %s216
      %p218 = pneg %p108
      %p219 = pneg %p105
      %p220 = pneg %p138
      %p221 = pneg %p135
      %s222 = smul.u32 4, %s20
      %s223 = smul.u32 2, %s21
      %p224 = scmp.lt.s32.totalorder %s19, 1
      %s225 = scalar_select %p224, %s19, 1
      %p226 = scmp.lt.s32.totalorder %s222, 3
      %s227 = scalar_select %p226, %s222, 3
      %p228 = scmp.lt.s32.totalorder %s223, 1
      %s229 = scalar_select %p228, %s223, 1
      %s230 = smul.addr %s227, 2
      %s231 = sadd.s32 %s229, %s230
      %s232 = smul.addr %s225, 8
      %s233 = sadd.s32 %s231, %s232
      %s234 = smul.addr %s233, 4
      %s235 = scalar_lea.vmem %s3, %s234
      %s236 = smul.u32 2, %s21
      %p237 = scmp.lt.s32.totalorder %s19, 1
      %s238 = scalar_select %p237, %s19, 1
      %p239 = scmp.lt.s32.totalorder %s236, 1
      %s240 = scalar_select %p239, %s236, 1
      %s241 = smul.addr %s238, 4
      %s242 = sadd.s32 %s240, %s241
      %s243 = smul.addr %s242, 8
      %s244 = scalar_lea.vmem %s0, %s243
      %s245 = smul.u32 2, %s21
      %s246 = smul.u32 4, %s20
      %p247 = scmp.lt.s32.totalorder %s246, 3
      %s248 = scalar_select %p247, %s246, 3
      %s249 = smul.addr %s248, 4
      %s250 = scalar_lea.vmem %s1, %s249
      %s251 = smul.u32 4, %s20
      %s252 = smul.u32 4, %s20
      %p253 = scmp.lt.s32.totalorder %s252, 3
      %s254 = scalar_select %p253, %s252, 3
      %s255 = smul.addr %s254, 8
      %s256 = scalar_lea.vmem %s2, %s255
      %s257 = smul.u32 4, %s20
      %s258 = smul.u32 4, %s20
      %s259 = smul.u32 2, %s21
      %p260 = scmp.lt.s32.totalorder %s19, 1
      %s261 = scalar_select %p260, %s19, 1
      %p262 = scmp.lt.s32.totalorder %s258, 3
      %s263 = scalar_select %p262, %s258, 3
      %p264 = scmp.lt.s32.totalorder %s259, 1
      %s265 = scalar_select %p264, %s259, 1
      %s266 = smul.addr %s263, 2
      %s267 = sadd.s32 %s265, %s266
      %s268 = smul.addr %s261, 8
      %s269 = sadd.s32 %s267, %s268
      %s270 = smul.addr %s269, 4
      %s271 = scalar_lea.vmem %s3, %s270
      %s272 = smul.u32 4, %s20
      %s273 = smul.u32 2, %s21
      %v275 = vld [vmem:[%s244] sm:$0xff]
      %v276 = vld [vmem:[%s244 + $0x8] sm:$0xff]
      %v277 = vld [vmem:[%s244 + $0x10] sm:$0xff]
      %v278 = vld [vmem:[%s244 + $0x18] sm:$0xff]
      %v279 = vpack.c.bf16 %v277, %v275
      %v280 = vpack.c.bf16 %v278, %v276
      %v281 = vld [vmem:[%s250] sm:$0xf]
      %v282 = vld [vmem:[%s250 + $0x4] sm:$0xf]
      %v283 = vld [vmem:[%s250 + $0x8] sm:$0xf]
      %v284 = vld [vmem:[%s250 + $0xc] sm:$0xf]
      %v285 = vld [vmem:[%s256] sm:$0xff]
      %v286 = vld [vmem:[%s256 + $0x8] sm:$0xff]
      %v287 = vld [vmem:[%s256 + $0x10] sm:$0xff]
      %v288 = vld [vmem:[%s256 + $0x18] sm:$0xff]
      %290 = vset.pattern.permute.xlu0 0
      %291 = vperm.xlu0 %290, %v285
      %v292 = vpop.permute.xlu0 %291
      %295 = vset.pattern.permute.xlu0 0
      %296 = vperm.xlu0 %295, %v286
      %v297 = vpop.permute.xlu0 %296
      %300 = vset.pattern.permute.xlu0 0
      %301 = vperm.xlu0 %300, %v287
      %v302 = vpop.permute.xlu0 %301
      %305 = vset.pattern.permute.xlu0 0
      %306 = vperm.xlu0 %305, %v288
      %v307 = vpop.permute.xlu0 %306
      %v313 = vunpack.c.l.b16 %v281
      %v314 = vunpack.c.l.b16 %v282
      %v315 = vunpack.c.l.b16 %v283
      %v316 = vunpack.c.l.b16 %v284
      %v317 = vpack.c.b16 %v314, %v313
      %v318 = vpack.c.b16 %v316, %v315
      %vm319 = vcmask 130048
      %v321 = vsel %vm319, %v317, 0
      %v324 = vsel %vm319, %v318, 0
      %326 = vmatprep.subr.bf16.mxu0 0
      %327 = vmatpush1.bf16.msra.mxu0 0
      %328 = vmatprep.subr.bf16.mxu0 0
      %329 = vmatpush1.bf16.msra.mxu0 0
      %330 = vmatprep.subr.bf16.mxu0 0
      %331 = vmatpush1.bf16.msra.mxu0 0
      %332 = vmatprep.subr.bf16.mxu0 0
      %333 = vmatpush1.bf16.msra.mxu0 0
      %334 = vmatprep.subr.bf16.mxu0 0
      %335 = vmatpush1.bf16.msra.mxu0 0
      %336 = vmatprep.subr.bf16.mxu0 0
      %337 = vmatpush1.bf16.msra.mxu0 0
      %338 = vmatprep.subr.bf16.mxu0 0
      %339 = vmatpush1.bf16.msra.mxu0 0
      %340 = vmatprep.subr.bf16.mxu0 %v280
      %341 = vmatpush1.bf16.msra.mxu0 %v279
      %342 = vmatprep.subr.bf16.mxu0 0
      %343 = vmatpush2.bf16.msra.mxu0 0
      %344 = vmatprep.subr.bf16.mxu0 0
      %345 = vmatpush2.bf16.msra.mxu0 0
      %346 = vmatprep.subr.bf16.mxu0 0
      %347 = vmatpush2.bf16.msra.mxu0 0
      %348 = vmatprep.subr.bf16.mxu0 0
      %349 = vmatpush2.bf16.msra.mxu0 0
      %350 = vmatprep.subr.bf16.mxu0 0
      %351 = vmatpush2.bf16.msra.mxu0 0
      %352 = vmatprep.subr.bf16.mxu0 0
      %353 = vmatpush2.bf16.msra.mxu0 0
      %354 = vmatprep.subr.bf16.mxu0 0
      %355 = vmatpush2.bf16.msra.mxu0 0
      %356 = vmatprep.subr.bf16.mxu0 0
      %357 = vmatpush2.bf16.msra.mxu0 0
      %358 = vmatprep.mubr.bf16.mxu0 0
      %359 = vmatmul.mubr.bf16.gmra.mxu0 %v321
      %v360 = vpop.f32.mrf.mxu0
      %v361 = vadd.f32 %v292, %v360
      %v362 = vpop.f32.mrf.mxu0
      %v363 = vadd.f32 %v292, %v362
      %v364 = vpop.f32.mrf.mxu0
      %v365 = vadd.f32 %v297, %v364
      %v366 = vpop.f32.mrf.mxu0
      %v367 = vadd.f32 %v297, %v366
      %368 = vmatprep.mubr.bf16.mxu0 0
      %369 = vmatmul.mubr.bf16.gmra.mxu0 %v324
      %v370 = vpop.f32.mrf.mxu0
      %v371 = vadd.f32 %v302, %v370
      %v372 = vpop.f32.mrf.mxu0
      %v373 = vadd.f32 %v302, %v372
      %v374 = vpop.f32.mrf.mxu0
      %v375 = vadd.f32 %v307, %v374
      %v376 = vpop.f32.mrf.mxu0
      %v377 = vadd.f32 %v307, %v376
      %378 = vdwg.mxu0
      %v379 = vmax.f32 %v361, 0.0
      %v380 = vmax.f32 %v363, 0.0
      %v381 = vmax.f32 %v365, 0.0
      %v382 = vmax.f32 %v367, 0.0
      %v383 = vmax.f32 %v371, 0.0
      %v384 = vmax.f32 %v373, 0.0
      %v385 = vmax.f32 %v375, 0.0
      %v386 = vmax.f32 %v377, 0.0
      %v387 = vpack.c.bf16 %v381, %v379
      %v388 = vpack.c.bf16 %v382, %v380
      %v389 = vpack.c.bf16 %v385, %v383
      %v390 = vpack.c.bf16 %v386, %v384
      %v395 = vunpack.c.l.b16 %v387
      %v396 = vunpack.c.l.b16 %v388
      %v397 = vunpack.c.h.b16 %v387
      %v398 = vunpack.c.h.b16 %v388
      %v399 = vunpack.c.l.b16 %v389
      %v400 = vunpack.c.l.b16 %v390
      %v401 = vunpack.c.h.b16 %v389
      %v402 = vunpack.c.h.b16 %v390
      %v403 = vpack.c.b16 %v396, %v395
      %v404 = vpack.c.b16 %v398, %v397
      %v405 = vpack.c.b16 %v400, %v399
      %v406 = vpack.c.b16 %v402, %v401
      %411 = vst [vmem:[%s271] sm:$0xff] %v403
      %412 = vst [vmem:[%s271 + $0x8] sm:$0xff] %v404
      %413 = vst [vmem:[%s271 + $0x10] sm:$0xff] %v405
      %414 = vst [vmem:[%s271 + $0x18] sm:$0xff] %v406
      %s415 = smul.u32 4, %s20
      %s416 = smul.u32 2, %s21
      %p417 = scmp.lt.s32.totalorder %s19, 1
      %s418 = scalar_select %p417, %s19, 1
      %p419 = scmp.lt.s32.totalorder %s415, 3
      %s420 = scalar_select %p419, %s415, 3
      %p421 = scmp.lt.s32.totalorder %s416, 1
      %s422 = scalar_select %p421, %s416, 1
      %s423 = smul.addr %s420, 2
      %s424 = sadd.s32 %s422, %s423
      %s425 = smul.addr %s418, 8
      %s426 = sadd.s32 %s424, %s425
      %s427 = smul.addr %s426, 4
      %s428 = scalar_lea.vmem %s3, %s427
      // Predicated region
      $region33: #{_lambda_.1} parent=31 // pred_check
        %p429 = pneg %p135
      $region34: #{_lambda_.1} parent=31 // pred_check_branch
        %431 = sbr.rel (%p429) target = $region36
      $region35: #{_lambda_.1} parent=31 // pred_region
        %s432 = smul.u32 4, %s20
        %s433 = smul.u32 2, %s21
      $region36: #{_lambda_.1} parent=31 // pred_fallthru
        _
    $region32: #{_lambda_.1} parent=5 // pred_fallthru
      _
    %p434 = scmp.le.s32.totalorder 2, %s9
    // Predicated region
    $region37: #{_lambda_.1} parent=5 // pred_check
      %p435 = pneg %p434
    $region38: #{_lambda_.1} parent=5 // pred_check_branch
      %437 = sbr.rel (%p435) target = $region40
    $region39: #{_lambda_.1} parent=5 // pred_region
      %s438 = ssub.s32 %s9, 2
      // Predicated region
      $region41: #{_lambda_.1} parent=39 // pred_check
        %p439 = pneg %p141
      $region42: #{_lambda_.1} parent=39 // pred_check_branch
        %441 = sbr.rel (%p439) target = $region44
      $region43: #{_lambda_.1} parent=39 // pred_region
        %s442 = smul.u32 4, %s23
        %s443 = smul.u32 2, %s24
        %p444 = scmp.lt.s32.totalorder %s22, 1
        %s445 = scalar_select %p444, %s22, 1
        %p446 = scmp.lt.s32.totalorder %s442, 3
        %s447 = scalar_select %p446, %s442, 3
        %p448 = scmp.lt.s32.totalorder %s443, 1
        %s449 = scalar_select %p448, %s443, 1
        %s450 = smul.addr %s447, 2
        %s451 = sadd.s32 %s449, %s450
        %s452 = smul.addr %s445, 8
        %s453 = sadd.s32 %s451, %s452
        %s454 = smul.addr %s453, 4
        %s455 = scalar_lea.vmem %s3, %s454
      $region44: #{_lambda_.1} parent=39 // pred_fallthru
        _
    $region40: #{_lambda_.1} parent=5 // pred_fallthru
      _
  $region6: #{_lambda_.1} parent=0 // loop_footer
    %s13 = sadd.s32 1, %s9
  $region7: #{_lambda_.1} parent=0 // loop_footer_branch
    %8 = sbr.rel target = $region3
  $region8: #{_lambda_.1} parent=0 // loop_exit
    _

</llo_original>
